<compile_context>
chip_gen: v7x
topology: tpu7x:2x2x1
jax: 0.10.0
libtpu: 0.0.40
codegen_flags: <defaults>
</compile_context>

<pallas_src>
import functools

import jax
import jax.numpy as jnp
from jax import lax
from jax.experimental import pallas as pl
from jax.experimental.pallas import tpu as pltpu

_LANE = 128


def _round_up(n, m):
    return (n + m - 1) // m * m


def ultimus_kernel(x_ref, w_ref, out_ref, *, d_out_pad):
    """Single-invocation ULTIMUS forward (3 dependent MXU matmuls).

    x_ref   : (B, D_in_pad)                        activation dtype (f32 here)
    w_ref   : (D_in_pad, 2*D_out_pad + D_in_pad)   [Wk^T | Wq^T/sqrt(D_out) | Wv^T@Wk],
                                                   zero-padded, MXU feed dtype (bf16)
    out_ref : (B, D_in_pad)                        lane-dense output, activation dtype
    """
    cdt = w_ref.dtype  # MXU feed dtype (bf16 on all generations; f32 also works)

    # One fused projection matmul, f32 accumulation.
    proj = jnp.dot(x_ref[...].astype(cdt), w_ref[...],
                   preferred_element_type=jnp.float32)

    # Lane-aligned (multiple-of-128) split of the fused result.
    mat1 = proj[:, 0 * d_out_pad:1 * d_out_pad]      # x @ Wk^T                 (B, D_out_pad)
    mat2 = proj[:, 1 * d_out_pad:2 * d_out_pad]      # x @ Wq^T / sqrt(D_out)   (B, D_out_pad)
    xvk = proj[:, 2 * d_out_pad:]                    # x @ (Wv^T @ Wk)          (B, D_in_pad)

    # Attention over the batch axis: (B, B). Zero-padded columns contribute nothing.
    scores = lax.dot_general(
        mat2.astype(cdt), mat1.astype(cdt),
        (((1,), (1,)), ((), ())),
        preferred_element_type=jnp.float32)

    # Numerically stable softmax in f32; divide runs on the EUP via approx reciprocal.
    m = jnp.max(scores, axis=-1, keepdims=True)
    e = jnp.exp(scores - m)
    s = jnp.sum(e, axis=-1, keepdims=True)
    am = e * pl.reciprocal(s, approx=True)           # (B, B)

    # out = am @ (x @ Wv^T @ Wk) == (am @ (x @ Wv^T)) @ Wk  (last matmul pre-fused).
    out = jnp.dot(am.astype(cdt), xvk.astype(cdt),
                  preferred_element_type=jnp.float32)  # (B, D_in_pad)
    out_ref[...] = out.astype(out_ref.dtype)


def prepare_ultimus_weights(wk, wq, wv, *, mxu_dtype=jnp.bfloat16):
    """One-time weight layout (off the hot path).

    wk/wq/wv: (D_out, D_in) nn.Linear-style weights.
    Returns (w_fused, d_out_pad) with
      w_fused: (D_in_pad, 2*D_out_pad + D_in_pad) = [Wk^T | Wq^T/sqrt(D_out) | Wv^T@Wk],
               zero-padded to 128-lane multiples, cast to the MXU feed dtype.
    """
    d_out, d_in = wk.shape
    d_in_p = _round_up(d_in, _LANE)
    d_out_p = _round_up(d_out, _LANE)
    scale = 1.0 / float(d_out) ** 0.5

    wk32 = wk.astype(jnp.float32)
    wq32 = wq.astype(jnp.float32)
    wv32 = wv.astype(jnp.float32)
    w_vk = wv32.T @ wk32                                 # (D_in, D_in), exact in f32

    w = jnp.zeros((d_in_p, 2 * d_out_p + d_in_p), jnp.float32)
    w = w.at[:d_in, 0 * d_out_p:0 * d_out_p + d_out].set(wk32.T)
    w = w.at[:d_in, 1 * d_out_p:1 * d_out_p + d_out].set(wq32.T * scale)
    w = w.at[:d_in, 2 * d_out_p:2 * d_out_p + d_in].set(w_vk)
    return w.astype(mxu_dtype), d_out_p


def ultimus_pallas(x, w_fused, *, d_out_pad):
    """Per-call path: pad x, run the gridless single-invocation kernel, slice the result.

    x: (B, D_in); w_fused: output of prepare_ultimus_weights.
    """
    B, d_in = x.shape
    d_in_p = w_fused.shape[0]

    # Zero-pad activations along features (zeros annihilated by the zero weight rows).
    x_p = jnp.zeros((B, d_in_p), x.dtype).at[:, :d_in].set(x)

    kernel = functools.partial(ultimus_kernel, d_out_pad=d_out_pad)
    vmem = pl.BlockSpec(memory_space=pltpu.MemorySpace.VMEM)

    # Tiny footprint (~0.2 MB): gridless, whole-array blocks; no vmem_limit / extra
    # buffering needed at these shapes.
    out_p = pl.pallas_call(
        kernel,
        out_shape=jax.ShapeDtypeStruct((B, d_in_p), x.dtype),
        in_specs=[vmem, vmem],
        out_specs=vmem,
    )(x_p, w_fused)

    return out_p[:, :d_in]


def ultimus_ref(x, wk, wq, wv):
    mat1 = x @ wk.T
    mat2 = x @ wq.T
    mat3 = x @ wv.T
    scores = (mat2 @ mat1.T) / jnp.sqrt(jnp.float32(wk.shape[0]))
    am = jax.nn.softmax(scores, axis=-1)
    z = am @ mat3
    return z @ wk


if __name__ == "__main__":
    # Shapes consistent with the assignment's ULTIMUS block: ULTIMUS(48, 8).
    B, D_in, D_out = 8, 48, 8

    key = jax.random.PRNGKey(0)
    kx, kk, kq, kv = jax.random.split(key, 4)

    x = jax.random.normal(kx, (B, D_in), dtype=jnp.float32)
    bound = 1.0 / (D_in ** 0.5)          # nn.Linear-style init; biases unused in forward.
    wk = jax.random.uniform(kk, (D_out, D_in), jnp.float32, -bound, bound)
    wq = jax.random.uniform(kq, (D_out, D_in), jnp.float32, -bound, bound)
    wv = jax.random.uniform(kv, (D_out, D_in), jnp.float32, -bound, bound)

    ref = ultimus_ref(x, wk, wq, wv)

    # --- Default path: bf16 MXU feeds (native on v5e/v6e/v7x), f32 accumulate/softmax. ---
    w_fused_bf16, d_out_pad = prepare_ultimus_weights(wk, wq, wv, mxu_dtype=jnp.bfloat16)
    w_fused_bf16 = jax.block_until_ready(w_fused_bf16)   # weight prep once, off hot path

    apply_bf16 = jax.jit(functools.partial(ultimus_pallas, d_out_pad=d_out_pad))
    out = jax.block_until_ready(apply_bf16(x, w_fused_bf16))
    assert out.shape == (B, D_in)
    assert out.dtype == x.dtype
    assert jnp.allclose(out, ref, atol=5e-2, rtol=5e-2), "bf16-MXU path mismatch vs reference"

    # --- f32 MXU-feed path (tight numerical check of the fused-weight algebra). ---
    w_fused_f32, _ = prepare_ultimus_weights(wk, wq, wv, mxu_dtype=jnp.float32)
    apply_f32 = jax.jit(functools.partial(ultimus_pallas, d_out_pad=d_out_pad))
    out32 = jax.block_until_ready(apply_f32(x, w_fused_f32))
    assert out32.shape == (B, D_in)
    assert jnp.allclose(out32, ref, atol=5e-3, rtol=5e-3), "f32 path mismatch vs reference"

    print("KERNEL_OK")
</pallas_src>

<mosaic_0001>
module attributes {stable_mosaic.version = 11 : i64} {
  func.func @ultimus_kernel(%arg0: memref<8x128xf32, #tpu.memory_space<vmem>>, %arg1: memref<128x384xbf16, #tpu.memory_space<vmem>>, %arg2: memref<8x128xf32, #tpu.memory_space<vmem>>) attributes {dimension_semantics = [], scalar_prefetch = 0 : i64, scratch_operands = 0 : i64, tpu.core_type = #tpu.core_type<tc>} {
    %c0 = arith.constant 0 : index
    %c0_0 = arith.constant 0 : index
    %0 = vector.load %arg0[%c0, %c0_0] : memref<8x128xf32, #tpu.memory_space<vmem>>, vector<8x128xf32>
    %1 = arith.truncf %0 : vector<8x128xf32> to vector<8x128xbf16>
    %c0_1 = arith.constant 0 : index
    %c0_2 = arith.constant 0 : index
    %2 = vector.load %arg1[%c0_1, %c0_2] : memref<128x384xbf16, #tpu.memory_space<vmem>>, vector<128x384xbf16>
    %cst = arith.constant dense<0.000000e+00> : vector<8x384xf32>
    %3 = tpu.matmul %1, %2, %cst {dimension_numbers = #tpu.dot_dimension_numbers<[1], [0], [0], [1], [0, 0, 1, 1], [], []>} : vector<8x128xbf16>, vector<128x384xbf16>, vector<8x384xf32> -> vector<8x384xf32>
    %4 = vector.extract_strided_slice %3 {offsets = [0, 0], sizes = [8, 128], strides = [1, 1]} : vector<8x384xf32> to vector<8x128xf32>
    %5 = vector.extract_strided_slice %3 {offsets = [0, 128], sizes = [8, 128], strides = [1, 1]} : vector<8x384xf32> to vector<8x128xf32>
    %6 = vector.extract_strided_slice %3 {offsets = [0, 256], sizes = [8, 128], strides = [1, 1]} : vector<8x384xf32> to vector<8x128xf32>
    %7 = arith.truncf %5 : vector<8x128xf32> to vector<8x128xbf16>
    %8 = arith.truncf %4 : vector<8x128xf32> to vector<8x128xbf16>
    %cst_3 = arith.constant dense<0.000000e+00> : vector<8x8xf32>
    %9 = tpu.matmul %7, %8, %cst_3 {dimension_numbers = #tpu.dot_dimension_numbers<[1], [1], [0], [0], [0, 0, 1, 0], [], []>} : vector<8x128xbf16>, vector<8x128xbf16>, vector<8x8xf32> -> vector<8x8xf32>
    %cst_4 = arith.constant dense<0xFF800000> : vector<8xf32>
    %10 = vector.multi_reduction <maximumf>, %9, %cst_4 [1] : vector<8x8xf32> to vector<8xf32>
    %11 = vector.shape_cast %10 : vector<8xf32> to vector<8x1xf32>
    %12 = vector.broadcast %11 : vector<8x1xf32> to vector<8x8xf32>
    %13 = arith.subf %9, %12 : vector<8x8xf32>
    %14 = math.exp %13 : vector<8x8xf32>
    %cst_5 = arith.constant dense<0.000000e+00> : vector<8xf32>
    %15 = vector.multi_reduction <add>, %14, %cst_5 [1] : vector<8x8xf32> to vector<8xf32>
    %16 = vector.shape_cast %15 : vector<8xf32> to vector<8x1xf32>
    %17 = tpu.reciprocal %16 {approx = true} : vector<8x1xf32> -> vector<8x1xf32>
    %18 = vector.broadcast %17 : vector<8x1xf32> to vector<8x8xf32>
    %19 = arith.mulf %14, %18 : vector<8x8xf32>
    %20 = arith.truncf %19 : vector<8x8xf32> to vector<8x8xbf16>
    %21 = arith.truncf %6 : vector<8x128xf32> to vector<8x128xbf16>
    %cst_6 = arith.constant dense<0.000000e+00> : vector<8x128xf32>
    %22 = tpu.matmul %20, %21, %cst_6 {dimension_numbers = #tpu.dot_dimension_numbers<[1], [0], [0], [1], [0, 0, 1, 1], [], []>} : vector<8x8xbf16>, vector<8x128xbf16>, vector<8x128xf32> -> vector<8x128xf32>
    %c0_7 = arith.constant 0 : index
    %c0_8 = arith.constant 0 : index
    %23 = vector.load %arg2[%c0_7, %c0_8] : memref<8x128xf32, #tpu.memory_space<vmem>>, vector<8x128xf32>
    tpu.vector_store %arg2[%c0_7, %c0_8], %22 {strides = array<i32>} : memref<8x128xf32, #tpu.memory_space<vmem>>, vector<8x128xf32>,
    return
  }
}

</mosaic_0001>

<llo_original>
// kernel: ultimus_pallas.1
$region0: #{ultimus_pallas.1}
  #allocation0 [shape = 'u32[]', space=smem, size = 0x4, offset = 0x4, fixed_abs, tag = 'smem constant byte address 0x4 - core index']
  #allocation1 [shape = 'u32[144,128]{1,0:T(1,128)}', space=vmem, size = 0x12000, scoped, tag = 'internal scratch']
  %s0 = inlined_call_operand.vmem [shape: f32[8,128], index: 0, kind: input, shape index: {}]
  %s1 = inlined_call_operand.hbm [shape: bf16[128,384], index: 1, kind: input, shape index: {}]
  %s2 = inlined_call_operand.hbm [shape: f32[8,128], index: 2, kind: output, shape index: {}]
  %s3 = sld [smem:[#allocation0]]
  $region22: #{ultimus_pallas.1} parent=0
    _
  %s5 = ssub.s32 1, %s3
  %s6 = scalar_select 0, %s5, %s3
  $region1: #{ultimus_pallas.1} parent=0
    #allocation2 [shape = 'u8[98304]{0}', space=vmem, size = 0x18000, scoped, tag = 'input window, operand 1, single buffered']
    #allocation3 [shape = 's32[1]{0}', space=sflag, size = 0x4, scoped, tag = 'scoped memory for ultimus_pallas.1']
    #allocation4 [shape = 's32[1]{0}', space=sflag, size = 0x4, scoped, tag = 'scoped memory for ultimus_pallas.1']
    #allocation5 [shape = 'u8[4096]{0}', space=vmem, size = 0x1000, scoped, tag = 'output window, operand 0, single buffered']
    %7 = vsyncpa [#allocation3], 0
    %8 = vsyncpa [#allocation4], 0
    // Predicated region
    $region2: #{ultimus_pallas.1} parent=1 // pred_check
      _
    $region3: #{ultimus_pallas.1} parent=1 // pred_check_branch
      %10 = sbr.rel (0) target = $region5
    $region4: #{ultimus_pallas.1} parent=1 // pred_region
      _
    $region5: #{ultimus_pallas.1} parent=1 // pred_fallthru
      _
    // Predicated region
    $region6: #{ultimus_pallas.1} parent=1 // pred_check
      _
    $region7: #{ultimus_pallas.1} parent=1 // pred_check_branch
      %12 = sbr.rel (0) target = $region9
    $region8: #{ultimus_pallas.1} parent=1 // pred_region
      %s14 = ssub.s32 3072, 3072
      %15 = vsyncadd [#allocation3], %s14
      %s16 = sshll.u32 [#allocation2], 4
      %s17 = int_to_ptr.vmem [resolvable:$true] %s16
      %22 = dma.hbm_to_vmem [thread:$0]  %s1, 3072, %s17, [#allocation3], 192, 192, 12
    $region9: #{ultimus_pallas.1} parent=1 // pred_fallthru
      _
    // Predicated region
    $region10: #{ultimus_pallas.1} parent=1 // pred_check
      _
    $region11: #{ultimus_pallas.1} parent=1 // pred_check_branch
      %24 = sbr.rel (0) target = $region13
    $region12: #{ultimus_pallas.1} parent=1 // pred_region
      %25 = dma.done [#allocation3], 3072
    $region13: #{ultimus_pallas.1} parent=1 // pred_fallthru
      _
    %v27 = vld [vmem:[%s0] sm:$0xff]
    %v28 = vpack.c.bf16 %v27, %v27
    %v29 = vld [vmem:[#allocation2] sm:$0xff]
    %v30 = vld [vmem:[#allocation2 + $0x8] sm:$0xf]
    %v31 = vld [vmem:[#allocation2 + $0xc] sm:$0xff]
    %v32 = vld [vmem:[#allocation2 + $0x14] sm:$0xf]
    %v33 = vld [vmem:[#allocation2 + $0x18] sm:$0xff]
    %v34 = vld [vmem:[#allocation2 + $0x20] sm:$0xf]
    %v35 = vld [vmem:[#allocation2 + $0x24] sm:$0xff]
    %v36 = vld [vmem:[#allocation2 + $0x2c] sm:$0xf]
    %v37 = vld [vmem:[#allocation2 + $0x30] sm:$0xff]
    %v38 = vld [vmem:[#allocation2 + $0x38] sm:$0xf]
    %v39 = vld [vmem:[#allocation2 + $0x3c] sm:$0xff]
    %v40 = vld [vmem:[#allocation2 + $0x44] sm:$0xf]
    %v41 = vld [vmem:[#allocation2 + $0x48] sm:$0xff]
    %v42 = vld [vmem:[#allocation2 + $0x50] sm:$0xf]
    %v43 = vld [vmem:[#allocation2 + $0x54] sm:$0xff]
    %v44 = vld [vmem:[#allocation2 + $0x5c] sm:$0xf]
    %v45 = vld [vmem:[#allocation2 + $0x60] sm:$0xff]
    %v46 = vld [vmem:[#allocation2 + $0x68] sm:$0xf]
    %v47 = vld [vmem:[#allocation2 + $0x6c] sm:$0xff]
    %v48 = vld [vmem:[#allocation2 + $0x74] sm:$0xf]
    %v49 = vld [vmem:[#allocation2 + $0x78] sm:$0xff]
    %v50 = vld [vmem:[#allocation2 + $0x80] sm:$0xf]
    %v51 = vld [vmem:[#allocation2 + $0x84] sm:$0xff]
    %v52 = vld [vmem:[#allocation2 + $0x8c] sm:$0xf]
    %v53 = vld [vmem:[#allocation2 + $0x90] sm:$0xff]
    %v54 = vld [vmem:[#allocation2 + $0x98] sm:$0xf]
    %v55 = vld [vmem:[#allocation2 + $0x9c] sm:$0xff]
    %v56 = vld [vmem:[#allocation2 + $0xa4] sm:$0xf]
    %v57 = vld [vmem:[#allocation2 + $0xa8] sm:$0xff]
    %v58 = vld [vmem:[#allocation2 + $0xb0] sm:$0xf]
    %v59 = vld [vmem:[#allocation2 + $0xb4] sm:$0xff]
    %v60 = vld [vmem:[#allocation2 + $0xbc] sm:$0xf]
    %v93 = vunpack.c.l.b16 %v29
    %v94 = vunpack.c.h.b16 %v29
    %v95 = vunpack.c.l.b16 %v30
    %v96 = vunpack.c.l.b16 %v31
    %v97 = vunpack.c.h.b16 %v31
    %v98 = vunpack.c.l.b16 %v32
    %v99 = vunpack.c.l.b16 %v33
    %v100 = vunpack.c.h.b16 %v33
    %v101 = vunpack.c.l.b16 %v34
    %v102 = vunpack.c.l.b16 %v35
    %v103 = vunpack.c.h.b16 %v35
    %v104 = vunpack.c.l.b16 %v36
    %v105 = vunpack.c.l.b16 %v37
    %v106 = vunpack.c.h.b16 %v37
    %v107 = vunpack.c.l.b16 %v38
    %v108 = vunpack.c.l.b16 %v39
    %v109 = vunpack.c.h.b16 %v39
    %v110 = vunpack.c.l.b16 %v40
    %v111 = vunpack.c.l.b16 %v41
    %v112 = vunpack.c.h.b16 %v41
    %v113 = vunpack.c.l.b16 %v42
    %v114 = vunpack.c.l.b16 %v43
    %v115 = vunpack.c.h.b16 %v43
    %v116 = vunpack.c.l.b16 %v44
    %v117 = vunpack.c.l.b16 %v45
    %v118 = vunpack.c.h.b16 %v45
    %v119 = vunpack.c.l.b16 %v46
    %v120 = vunpack.c.l.b16 %v47
    %v121 = vunpack.c.h.b16 %v47
    %v122 = vunpack.c.l.b16 %v48
    %v123 = vunpack.c.l.b16 %v49
    %v124 = vunpack.c.h.b16 %v49
    %v125 = vunpack.c.l.b16 %v50
    %v126 = vunpack.c.l.b16 %v51
    %v127 = vunpack.c.h.b16 %v51
    %v128 = vunpack.c.l.b16 %v52
    %v129 = vunpack.c.l.b16 %v53
    %v130 = vunpack.c.h.b16 %v53
    %v131 = vunpack.c.l.b16 %v54
    %v132 = vunpack.c.l.b16 %v55
    %v133 = vunpack.c.h.b16 %v55
    %v134 = vunpack.c.l.b16 %v56
    %v135 = vunpack.c.l.b16 %v57
    %v136 = vunpack.c.h.b16 %v57
    %v137 = vunpack.c.l.b16 %v58
    %v138 = vunpack.c.l.b16 %v59
    %v139 = vunpack.c.h.b16 %v59
    %v140 = vunpack.c.l.b16 %v60
    %v141 = vpack.c.b16 %v96, %v93
    %v142 = vpack.c.b16 %v97, %v94
    %v143 = vpack.c.b16 %v98, %v95
    %v144 = vpack.c.b16 %v102, %v99
    %v145 = vpack.c.b16 %v103, %v100
    %v146 = vpack.c.b16 %v104, %v101
    %v147 = vpack.c.b16 %v108, %v105
    %v148 = vpack.c.b16 %v109, %v106
    %v149 = vpack.c.b16 %v110, %v107
    %v150 = vpack.c.b16 %v114, %v111
    %v151 = vpack.c.b16 %v115, %v112
    %v152 = vpack.c.b16 %v116, %v113
    %v153 = vpack.c.b16 %v120, %v117
    %v154 = vpack.c.b16 %v121, %v118
    %v155 = vpack.c.b16 %v122, %v119
    %v156 = vpack.c.b16 %v126, %v123
    %v157 = vpack.c.b16 %v127, %v124
    %v158 = vpack.c.b16 %v128, %v125
    %v159 = vpack.c.b16 %v132, %v129
    %v160 = vpack.c.b16 %v133, %v130
    %v161 = vpack.c.b16 %v134, %v131
    %v162 = vpack.c.b16 %v138, %v135
    %v163 = vpack.c.b16 %v139, %v136
    %v164 = vpack.c.b16 %v140, %v137
    %189 = vmatprep.subr.bf16.mxu0 %v142
    %190 = vmatpush1.bf16.msra.mxu0 %v141
    %191 = vmatprep.subr.bf16.mxu0 %v145
    %192 = vmatpush1.bf16.msra.mxu0 %v144
    %193 = vmatprep.subr.bf16.mxu0 %v148
    %194 = vmatpush1.bf16.msra.mxu0 %v147
    %195 = vmatprep.subr.bf16.mxu0 %v151
    %196 = vmatpush1.bf16.msra.mxu0 %v150
    %197 = vmatprep.subr.bf16.mxu0 %v154
    %198 = vmatpush1.bf16.msra.mxu0 %v153
    %199 = vmatprep.subr.bf16.mxu0 %v157
    %200 = vmatpush1.bf16.msra.mxu0 %v156
    %201 = vmatprep.subr.bf16.mxu0 %v160
    %202 = vmatpush1.bf16.msra.mxu0 %v159
    %203 = vmatprep.subr.bf16.mxu0 %v163
    %204 = vmatpush1.bf16.msra.mxu0 %v162
    %205 = vmatprep.subr.bf16.mxu0 0
    %206 = vmatpush1.bf16.msra.mxu0 0
    %207 = vmatprep.subr.bf16.mxu0 0
    %208 = vmatpush1.bf16.msra.mxu0 0
    %209 = vmatprep.subr.bf16.mxu0 0
    %210 = vmatpush1.bf16.msra.mxu0 0
    %211 = vmatprep.subr.bf16.mxu0 0
    %212 = vmatpush1.bf16.msra.mxu0 0
    %213 = vmatprep.subr.bf16.mxu0 0
    %214 = vmatpush1.bf16.msra.mxu0 0
    %215 = vmatprep.subr.bf16.mxu0 0
    %216 = vmatpush1.bf16.msra.mxu0 0
    %217 = vmatprep.subr.bf16.mxu0 0
    %218 = vmatpush1.bf16.msra.mxu0 0
    %219 = vmatprep.subr.bf16.mxu0 0
    %220 = vmatpush1.bf16.msra.mxu0 0
    %221 = vmatprep.mubr.bf16.mxu0 0
    %222 = vmatmul.mubr.bf16.gmra.mrb[0].mxu0 %v28
    %v223 = vpop.f32.mrb[0].mxu0
    %v224 = vadd.f32 0.0, %v223
    %v225 = vpop.f32.mrb[0].mxu0
    %v226 = vadd.f32 0.0, %v225
    %v227 = vpop.f32.mrb[0].mxu0
    %v228 = vpop.f32.mrb[0].mxu0
    %229 = vdwg.mxu0
    %230 = vmatprep.subr.bf16.mxu0 0
    %231 = vmatpush1.bf16.msra.mxu0 %v143
    %232 = vmatprep.subr.bf16.mxu0 0
    %233 = vmatpush1.bf16.msra.mxu0 %v146
    %234 = vmatprep.subr.bf16.mxu0 0
    %235 = vmatpush1.bf16.msra.mxu0 %v149
    %236 = vmatprep.subr.bf16.mxu0 0
    %237 = vmatpush1.bf16.msra.mxu0 %v152
    %238 = vmatprep.subr.bf16.mxu0 0
    %239 = vmatpush1.bf16.msra.mxu0 %v155
    %240 = vmatprep.subr.bf16.mxu0 0
    %241 = vmatpush1.bf16.msra.mxu0 %v158
    %242 = vmatprep.subr.bf16.mxu0 0
    %243 = vmatpush1.bf16.msra.mxu0 %v161
    %244 = vmatprep.subr.bf16.mxu0 0
    %245 = vmatpush1.bf16.msra.mxu0 %v164
    %246 = vmatprep.subr.bf16.mxu0 0
    %247 = vmatpush1.bf16.msra.mxu0 0
    %248 = vmatprep.subr.bf16.mxu0 0
    %249 = vmatpush1.bf16.msra.mxu0 0
    %250 = vmatprep.subr.bf16.mxu0 0
    %251 = vmatpush1.bf16.msra.mxu0 0
    %252 = vmatprep.subr.bf16.mxu0 0
    %253 = vmatpush1.bf16.msra.mxu0 0
    %254 = vmatprep.subr.bf16.mxu0 0
    %255 = vmatpush1.bf16.msra.mxu0 0
    %256 = vmatprep.subr.bf16.mxu0 0
    %257 = vmatpush1.bf16.msra.mxu0 0
    %258 = vmatprep.subr.bf16.mxu0 0
    %259 = vmatpush1.bf16.msra.mxu0 0
    %260 = vmatprep.subr.bf16.mxu0 0
    %261 = vmatpush1.bf16.msra.mxu0 0
    %262 = vmatprep.mubr.bf16.mxu0 0
    %263 = vmatmul.mubr.bf16.gmra.mrb[0].mxu0 %v28
    %v264 = vpop.f32.mrb[0].mxu0
    %v265 = vadd.f32 0.0, %v264
    %v266 = vpop.f32.mrb[0].mxu0
    %v267 = vpop.f32.mrb[0].mxu0
    %v268 = vpop.f32.mrb[0].mxu0
    %269 = vdwg.mxu0
    %v270 = vpack.c.bf16 %v226, %v226
    %v271 = vpack.c.bf16 %v224, %v224
    %272 = vmatprep.subr.bf16.mxu0 0
    %273 = vmatpush1.bf16.xpose.msra.mxu0 %v271
    %274 = vmatprep.subr.bf16.mxu0 0
    %275 = vmatpush1.bf16.xpose.msra.mxu0 0
    %276 = vmatprep.subr.bf16.mxu0 0
    %277 = vmatpush1.bf16.xpose.msra.mxu0 0
    %278 = vmatprep.subr.bf16.mxu0 0
    %279 = vmatpush1.bf16.xpose.msra.mxu0 0
    %280 = vmatprep.subr.bf16.mxu0 0
    %281 = vmatpush1.bf16.xpose.msra.mxu0 0
    %282 = vmatprep.subr.bf16.mxu0 0
    %283 = vmatpush1.bf16.xpose.msra.mxu0 0
    %284 = vmatprep.subr.bf16.mxu0 0
    %285 = vmatpush1.bf16.xpose.msra.mxu0 0
    %286 = vmatprep.subr.bf16.mxu0 0
    %287 = vmatpush1.bf16.xpose.msra.mxu0 0
    %288 = vmatprep.subr.bf16.mxu0 0
    %289 = vmatpush1.bf16.xpose.msra.mxu0 0
    %290 = vmatprep.subr.bf16.mxu0 0
    %291 = vmatpush1.bf16.xpose.msra.mxu0 0
    %292 = vmatprep.subr.bf16.mxu0 0
    %293 = vmatpush1.bf16.xpose.msra.mxu0 0
    %294 = vmatprep.subr.bf16.mxu0 0
    %295 = vmatpush1.bf16.xpose.msra.mxu0 0
    %296 = vmatprep.subr.bf16.mxu0 0
    %297 = vmatpush1.bf16.xpose.msra.mxu0 0
    %298 = vmatprep.subr.bf16.mxu0 0
    %299 = vmatpush1.bf16.xpose.msra.mxu0 0
    %300 = vmatprep.subr.bf16.mxu0 0
    %301 = vmatpush1.bf16.xpose.msra.mxu0 0
    %302 = vmatprep.subr.bf16.mxu0 0
    %303 = vmatpush1.bf16.xpose.msra.mxu0 0
    %304 = vmatprep.mubr.bf16.mxu0 0
    %305 = vmatmul.mubr.bf16.gmra.mrb[0].mxu0 %v270
    %v306 = vpop.f32.mrb[0].mxu0
    %v307 = vadd.f32 0.0, %v306
    %v308 = vpop.f32.mrb[0].mxu0
    %v309 = vpop.f32.mrb[0].mxu0
    %v310 = vpop.f32.mrb[0].mxu0
    %311 = vdwg.mxu0
    %vm312 = vcmask 64512
    %v313 = vsel %vm312, %v307, -inf
    %314 = vmax.xlane.f32.xlu0 %v313
    %v315 = vpop.xlane.xlu0 %314
    %v316 = vsub.f32 %v307, %v315
    %v317 = vmul.f32 %v316, 1.442695
    %v318 = vpow.pop %v317
    %v319 = vsel %vm312, %v318, 0.0
    %320 = vadd.xlane.f32.xlu0 %v319
    %v321 = vpop.xlane.xlu0 %320
    %v322 = vrcp.pop %v321
    %v323 = vmul.f32 %v318, %v322
    %v324 = vpack.c.bf16 %v323, %v323
    %v325 = vpack.c.bf16 %v265, %v265
    %v327 = vsel %vm312, %v324, 0
    %vm329 = vcmask 1043456
    %v331 = vsel %vm329, %v325, 0
    %333 = vmatprep.subr.bf16.mxu0 0
    %334 = vmatpush1.bf16.msra.mxu0 %v331
    %335 = vmatprep.subr.bf16.mxu0 0
    %336 = vmatpush1.bf16.msra.mxu0 0
    %337 = vmatprep.subr.bf16.mxu0 0
    %338 = vmatpush1.bf16.msra.mxu0 0
    %339 = vmatprep.subr.bf16.mxu0 0
    %340 = vmatpush1.bf16.msra.mxu0 0
    %341 = vmatprep.subr.bf16.mxu0 0
    %342 = vmatpush1.bf16.msra.mxu0 0
    %343 = vmatprep.subr.bf16.mxu0 0
    %344 = vmatpush1.bf16.msra.mxu0 0
    %345 = vmatprep.subr.bf16.mxu0 0
    %346 = vmatpush1.bf16.msra.mxu0 0
    %347 = vmatprep.subr.bf16.mxu0 0
    %348 = vmatpush1.bf16.msra.mxu0 0
    %349 = vmatprep.subr.bf16.mxu0 0
    %350 = vmatpush1.bf16.msra.mxu0 0
    %351 = vmatprep.subr.bf16.mxu0 0
    %352 = vmatpush1.bf16.msra.mxu0 0
    %353 = vmatprep.subr.bf16.mxu0 0
    %354 = vmatpush1.bf16.msra.mxu0 0
    %355 = vmatprep.subr.bf16.mxu0 0
    %356 = vmatpush1.bf16.msra.mxu0 0
    %357 = vmatprep.subr.bf16.mxu0 0
    %358 = vmatpush1.bf16.msra.mxu0 0
    %359 = vmatprep.subr.bf16.mxu0 0
    %360 = vmatpush1.bf16.msra.mxu0 0
    %361 = vmatprep.subr.bf16.mxu0 0
    %362 = vmatpush1.bf16.msra.mxu0 0
    %363 = vmatprep.subr.bf16.mxu0 0
    %364 = vmatpush1.bf16.msra.mxu0 0
    %365 = vmatprep.mubr.bf16.mxu0 0
    %366 = vmatmul.mubr.bf16.gmra.mrb[0].mxu0 %v327
    %v367 = vpop.f32.mrb[0].mxu0
    %v368 = vadd.f32 0.0, %v367
    %v369 = vpop.f32.mrb[0].mxu0
    %v370 = vpop.f32.mrb[0].mxu0
    %v371 = vpop.f32.mrb[0].mxu0
    %372 = vdwg.mxu0
    %373 = vst [vmem:[#allocation5] sm:$0xff] %v368
    // Predicated region
    $region14: #{ultimus_pallas.1} parent=1 // pred_check
      _
    $region15: #{ultimus_pallas.1} parent=1 // pred_check_branch
      %375 = sbr.rel (0) target = $region17
    $region16: #{ultimus_pallas.1} parent=1 // pred_region
      %s377 = ssub.s32 128, 128
      %378 = vsyncadd [#allocation4], %s377
      %s380 = sshll.u32 [#allocation5], 4
      %s381 = int_to_ptr.vmem [resolvable:$true] %s380
      %383 = dma.vmem_to_hbm [thread:$0]  %s381, 128, %s2, [#allocation4]
    $region17: #{ultimus_pallas.1} parent=1 // pred_fallthru
      _
    // Predicated region
    $region18: #{ultimus_pallas.1} parent=1 // pred_check
      _
    $region19: #{ultimus_pallas.1} parent=1 // pred_check_branch
      %385 = sbr.rel (0) target = $region21
    $region20: #{ultimus_pallas.1} parent=1 // pred_region
      %386 = dma.done [#allocation4], 128
    $region21: #{ultimus_pallas.1} parent=1 // pred_fallthru
      _
    %387 = vsyncpa [#allocation3], 1
    %388 = vsyncpa [#allocation4], 1

</llo_original>
